<compile_context>
chip_gen: v7x
topology: tpu7x:2x2x1
jax: 0.10.0
libtpu: 0.0.40
codegen_flags: <defaults>
</compile_context>

<pallas_src>
import jax
import jax.numpy as jnp
from jax import lax
from jax.experimental import pallas as pl
from jax.experimental.pallas import tpu as pltpu

HIDDEN = 128


def _round_up(x, m):
    return (x + m - 1) // m * m


def _disc_kernel(x_ref, w1_ref, b1_ref, w2_ref, b2_ref, o_ref):
    # x_ref:  (tb, img_dim)   VMEM   (batch tile; last block may contain
    #                                 out-of-bounds garbage rows -> masked out)
    # w1_ref: (img_dim, 128)  VMEM   (resident: constant index map)
    # b1_ref: (1, 128)        VMEM
    # w2_ref: (1, 128)        VMEM   (PyTorch-layout row of the 128->1 Linear)
    # b2_ref: (1, 1)          VMEM
    # o_ref:  (1, tb)         VMEM   (lane-dense output row)

    # ---- Linear 1 (MXU) + bias, f32 accumulation ----
    h = jnp.dot(x_ref[...], w1_ref[...],
                preferred_element_type=jnp.float32) + b1_ref[...]

    # ---- LeakyReLU(0.1) (VPU) ----
    h = jnp.maximum(h, 0.1 * h)

    # ---- Linear 2: 128 -> 1, produced lane-dense as (1, tb) ----
    # z[0, m] = sum_k w2[0, k] * h[m, k]   ==   (h @ w2.T)[m, 0]
    z = lax.dot_general(w2_ref[...], h, (((1,), (1,)), ((), ())),
                        preferred_element_type=jnp.float32) + b2_ref[...]

    # ---- Sigmoid (exact, matches f32 reference) ----
    o_ref[...] = (1.0 / (1.0 + jnp.exp(-z))).astype(o_ref.dtype)


def discriminator_forward(x, w1, b1, w2, b2, *, tb=512, compute_dtype=None):
    """x: (B, img_dim) float32 -> (B, 1) float32 (sigmoid probabilities).

    tb: batch tile; rounded to a multiple of 128.  512 (default) and 1024 fit the
        default scoped-VMEM limit on v5e/v6e/v7x; larger needs vmem_limit_bytes.
    compute_dtype: optionally jnp.bfloat16 to halve HBM traffic on x/w1 — only a
        real win if the caller already stores x as bf16 in HBM (expect ~1e-2
        deviation from the f32 reference if used).
    """
    B, img_dim = x.shape
    assert w1.shape == (img_dim, HIDDEN)
    assert b1.shape == (1, HIDDEN)
    assert w2.shape == (1, HIDDEN)
    assert b2.shape == (1, 1)

    # Batch tile: multiple of 128, no bigger than the (128-rounded) batch.
    tb = max(128, _round_up(tb, 128))
    tb = min(tb, _round_up(B, 128))
    grid = pl.cdiv(B, tb)

    if compute_dtype is not None:
        # NOTE: for the full benefit, store x in compute_dtype upstream instead of
        # relying on this cast (it is a separate XLA pass over HBM).
        x = x.astype(compute_dtype)
        w1 = w1.astype(compute_dtype)

    out_row = pl.pallas_call(
        _disc_kernel,
        out_shape=jax.ShapeDtypeStruct((1, B), jnp.float32),
        grid_spec=pltpu.PrefetchScalarGridSpec(
            num_scalar_prefetch=0,
            grid=(grid,),
            in_specs=[
                # x tile: last dim == full array dim (legal even if % 128 != 0),
                # last batch block masked by the pipeline.
                pl.BlockSpec((tb, img_dim), lambda i: (i, 0)),
                pl.BlockSpec((img_dim, HIDDEN), lambda i: (0, 0)),  # w1 (resident)
                pl.BlockSpec((1, HIDDEN), lambda i: (0, 0)),        # b1
                pl.BlockSpec((1, HIDDEN), lambda i: (0, 0)),        # w2 row
                pl.BlockSpec((1, 1), lambda i: (0, 0)),             # b2
            ],
            out_specs=pl.BlockSpec((1, tb), lambda i: (0, i)),      # lane-dense
        ),
        compiler_params=pltpu.CompilerParams(
            # Batch tiles are independent.
            dimension_semantics=("parallel",),
        ),
    )(x, w1, b1, w2, b2)

    # (1, B) row-major == (B, 1) row-major.
    return out_row.reshape(B, 1)


def init_params(key, img_dim):
    """PyTorch nn.Linear default init (uniform +/- 1/sqrt(fan_in))."""
    k1, k2, k3, k4 = jax.random.split(key, 4)
    bound1 = 1.0 / jnp.sqrt(img_dim)
    bound2 = 1.0 / jnp.sqrt(HIDDEN)
    w1 = jax.random.uniform(k1, (img_dim, HIDDEN), jnp.float32, -bound1, bound1)
    b1 = jax.random.uniform(k2, (1, HIDDEN), jnp.float32, -bound1, bound1)
    w2 = jax.random.uniform(k3, (1, HIDDEN), jnp.float32, -bound2, bound2)  # PyTorch (out,in)
    b2 = jax.random.uniform(k4, (1, 1), jnp.float32, -bound2, bound2)
    return w1, b1, w2, b2


def _reference(x, w1, b1, w2, b2):
    h = x @ w1 + b1
    h = jnp.where(h >= 0, h, 0.1 * h)
    z = h @ w2.T + b2
    return 1.0 / (1.0 + jnp.exp(-z))


if __name__ == "__main__":
    key = jax.random.PRNGKey(0)
    kx, kp = jax.random.split(key)

    img_dim = 784  # MNIST-flattened GAN discriminator input
    w1, b1, w2, b2 = init_params(kp, img_dim)

    # batch=8:    single tile, heavy row masking.
    # batch=300:  single tile with a ragged tail (no padding copies anywhere).
    # batch=1200: multi-tile grid (tb=512) + partial final tile.
    for batch in (8, 300, 1200):
        x = jax.random.normal(jax.random.fold_in(kx, batch),
                              (batch, img_dim), jnp.float32)
        out = jax.block_until_ready(discriminator_forward(x, w1, b1, w2, b2))
        ref = _reference(x, w1, b1, w2, b2)
        assert out.shape == (batch, 1)
        assert jnp.allclose(out, ref, atol=3e-5, rtol=3e-5), (
            f"mismatch at batch={batch}: max abs err "
            f"{jnp.max(jnp.abs(out - ref))}")

    print("KERNEL_OK")
</pallas_src>

<mosaic_0001>
module attributes {stable_mosaic.version = 11 : i64} {
  func.func @_disc_kernel(%arg0: i32, %arg1: memref<128x784xf32, #tpu.memory_space<vmem>>, %arg2: memref<784x128xf32, #tpu.memory_space<vmem>>, %arg3: memref<1x128xf32, #tpu.memory_space<vmem>>, %arg4: memref<1x128xf32, #tpu.memory_space<vmem>>, %arg5: memref<1x1xf32, #tpu.memory_space<vmem>>, %arg6: memref<1x128xf32, #tpu.memory_space<vmem>>) attributes {dimension_semantics = [#tpu.dimension_semantics<parallel>], iteration_bounds = array<i64: 1>, scalar_prefetch = 0 : i64, scratch_operands = 0 : i64, tpu.core_type = #tpu.core_type<tc>, window_params = [{transform_indices = @transform_0, window_bounds = array<i64: 128, 784>}, {pipeline_mode = #tpu.pipeline_mode<synchronous>, transform_indices = @transform_1, window_bounds = array<i64: 784, 128>}, {pipeline_mode = #tpu.pipeline_mode<synchronous>, transform_indices = @transform_2, window_bounds = array<i64: 1, 128>}, {pipeline_mode = #tpu.pipeline_mode<synchronous>, transform_indices = @transform_3, window_bounds = array<i64: 1, 128>}, {pipeline_mode = #tpu.pipeline_mode<synchronous>, transform_indices = @transform_4, window_bounds = array<i64: 1, 1>}, {transform_indices = @transform_5, window_bounds = array<i64: 1, 128>}]} {
    %c0 = arith.constant 0 : index
    %c0_0 = arith.constant 0 : index
    %0 = vector.load %arg1[%c0, %c0_0] : memref<128x784xf32, #tpu.memory_space<vmem>>, vector<128x784xf32>
    %c0_1 = arith.constant 0 : index
    %c0_2 = arith.constant 0 : index
    %1 = vector.load %arg2[%c0_1, %c0_2] : memref<784x128xf32, #tpu.memory_space<vmem>>, vector<784x128xf32>
    %cst = arith.constant dense<0.000000e+00> : vector<128x128xf32>
    %2 = tpu.matmul %0, %1, %cst {dimension_numbers = #tpu.dot_dimension_numbers<[1], [0], [0], [1], [0, 0, 1, 1], [], []>} : vector<128x784xf32>, vector<784x128xf32>, vector<128x128xf32> -> vector<128x128xf32>
    %c0_3 = arith.constant 0 : index
    %c0_4 = arith.constant 0 : index
    %3 = vector.load %arg3[%c0_3, %c0_4] : memref<1x128xf32, #tpu.memory_space<vmem>>, vector<1x128xf32>
    %4 = vector.broadcast %3 : vector<1x128xf32> to vector<128x128xf32>
    %5 = arith.addf %2, %4 : vector<128x128xf32>
    %cst_5 = arith.constant 1.000000e-01 : f32
    %6 = vector.broadcast %cst_5 : f32 to vector<128x128xf32>
    %7 = arith.mulf %6, %5 : vector<128x128xf32>
    %8 = arith.maximumf %5, %7 : vector<128x128xf32>
    %c0_6 = arith.constant 0 : index
    %c0_7 = arith.constant 0 : index
    %9 = vector.load %arg4[%c0_6, %c0_7] : memref<1x128xf32, #tpu.memory_space<vmem>>, vector<1x128xf32>
    %cst_8 = arith.constant dense<0.000000e+00> : vector<1x128xf32>
    %10 = tpu.matmul %9, %8, %cst_8 {dimension_numbers = #tpu.dot_dimension_numbers<[1], [1], [0], [0], [0, 0, 1, 0], [], []>} : vector<1x128xf32>, vector<128x128xf32>, vector<1x128xf32> -> vector<1x128xf32>
    %c0_9 = arith.constant 0 : index
    %c0_10 = arith.constant 0 : index
    %11 = vector.load %arg5[%c0_9, %c0_10] : memref<1x1xf32, #tpu.memory_space<vmem>>, vector<1x1xf32>
    %12 = vector.broadcast %11 : vector<1x1xf32> to vector<1x128xf32>
    %13 = arith.addf %10, %12 : vector<1x128xf32>
    %cst_11 = arith.constant 0.000000e+00 : f32
    %14 = vector.broadcast %cst_11 : f32 to vector<1x128xf32>
    %15 = arith.subf %14, %13 : vector<1x128xf32>
    %16 = math.exp %15 : vector<1x128xf32>
    %cst_12 = arith.constant 1.000000e+00 : f32
    %17 = vector.broadcast %cst_12 : f32 to vector<1x128xf32>
    %18 = arith.addf %17, %16 : vector<1x128xf32>
    %cst_13 = arith.constant 1.000000e+00 : f32
    %19 = vector.broadcast %cst_13 : f32 to vector<1x128xf32>
    %20 = arith.divf %19, %18 : vector<1x128xf32>
    %c0_14 = arith.constant 0 : index
    %c0_15 = arith.constant 0 : index
    %21 = vector.load %arg6[%c0_14, %c0_15] : memref<1x128xf32, #tpu.memory_space<vmem>>, vector<1x128xf32>
    tpu.vector_store %arg6[%c0_14, %c0_15], %20 {strides = array<i32>} : memref<1x128xf32, #tpu.memory_space<vmem>>, vector<1x128xf32>,
    return
  }
  func.func @transform_0(%arg0: i32) -> (i32, i32) {
    %c0_i32 = arith.constant 0 : i32
    %c0_i32_0 = arith.constant 0 : i32
    return %arg0, %c0_i32 : i32, i32
  }
  func.func @transform_1(%arg0: i32) -> (i32, i32) {
    %c0_i32 = arith.constant 0 : i32
    %c0_i32_0 = arith.constant 0 : i32
    %c0_i32_1 = arith.constant 0 : i32
    return %c0_i32, %c0_i32_0 : i32, i32
  }
  func.func @transform_2(%arg0: i32) -> (i32, i32) {
    %c0_i32 = arith.constant 0 : i32
    %c0_i32_0 = arith.constant 0 : i32
    %c0_i32_1 = arith.constant 0 : i32
    return %c0_i32, %c0_i32_0 : i32, i32
  }
  func.func @transform_3(%arg0: i32) -> (i32, i32) {
    %c0_i32 = arith.constant 0 : i32
    %c0_i32_0 = arith.constant 0 : i32
    %c0_i32_1 = arith.constant 0 : i32
    return %c0_i32, %c0_i32_0 : i32, i32
  }
  func.func @transform_4(%arg0: i32) -> (i32, i32) {
    %c0_i32 = arith.constant 0 : i32
    %c0_i32_0 = arith.constant 0 : i32
    %c0_i32_1 = arith.constant 0 : i32
    return %c0_i32, %c0_i32_0 : i32, i32
  }
  func.func @transform_5(%arg0: i32) -> (i32, i32) {
    %c0_i32 = arith.constant 0 : i32
    %c0_i32_0 = arith.constant 0 : i32
    return %c0_i32, %arg0 : i32, i32
  }
}

</mosaic_0001>

<llo_original>
// kernel: tpu_custom_call.1
$region0: #{tpu_custom_call.1}
  #allocation0 [shape = 'u32[]', space=smem, size = 0x4, offset = 0x4, fixed_abs, tag = 'smem constant byte address 0x4 - core index']
  #allocation1 [shape = 'u32[144,128]{1,0:T(1,128)}', space=vmem, size = 0x12000, scoped, tag = 'internal scratch']
  #allocation2 [shape = 'f32[1,1]{1,0:T(1,128)S(1)}', space=vmem, size = 0x200, scoped, tag = 'scoped memory for tpu_custom_call.1']
  %s0 = inlined_call_operand.hbm [shape: f32[8,784], index: 0, kind: input, shape index: {}]
  %s1 = inlined_call_operand.hbm [shape: f32[784,128], index: 1, kind: input, shape index: {}]
  %s2 = inlined_call_operand.vmem [shape: f32[1,128], index: 2, kind: input, shape index: {}]
  %s3 = inlined_call_operand.vmem [shape: f32[1,128], index: 3, kind: input, shape index: {}]
  %s4 = inlined_call_operand.<no memory space> [shape: f32[1,1], index: 4, kind: input, shape index: {}]
  %s5 = inlined_call_operand.hbm [shape: f32[1,8], index: 5, kind: output, shape index: {}]
  %s6 = sld [smem:[#allocation0]]
  $region38: #{tpu_custom_call.1} parent=0
    _
  %s8 = ssub.s32 1, %s6
  %s9 = scalar_select 0, %s8, %s6
  %v10 = vstv %s4
  %11 = vst [vmem:[#allocation2] sm:$0x1] %v10
  $region1: #{tpu_custom_call.1} parent=0
    #allocation3 [shape = 'u8[458752]{0}', space=vmem, size = 0x70000, scoped, tag = 'input window, operand 0, single buffered']
    #allocation4 [shape = 's32[1]{0}', space=sflag, size = 0x4, scoped, tag = 'scoped memory for tpu_custom_call.1']
    #allocation5 [shape = 's32[1]{0}', space=sflag, size = 0x4, scoped, tag = 'scoped memory for tpu_custom_call.1']
    #allocation6 [shape = 'u8[401408]{0}', space=vmem, size = 0x62000, scoped, tag = 'input window, operand 1, single buffered']
    #allocation7 [shape = 's32[1]{0}', space=sflag, size = 0x4, scoped, tag = 'scoped memory for tpu_custom_call.1']
    #allocation8 [shape = 'u8[512]{0}', space=vmem, size = 0x400, scoped, tag = 'output window, operand 0, single buffered']
    %12 = vsyncpa [#allocation4], 0
    %13 = vsyncpa [#allocation7], 0
    %14 = vsyncpa [#allocation5], 0
    // Predicated region
    $region2: #{tpu_custom_call.1} parent=1 // pred_check
      _
    $region3: #{tpu_custom_call.1} parent=1 // pred_check_branch
      %16 = sbr.rel (0) target = $region5
    $region4: #{tpu_custom_call.1} parent=1 // pred_region
      %s18 = ssub.s32 14336, 896
      %19 = vsyncadd [#allocation4], %s18
      %s20 = sshll.u32 [#allocation3], 4
      %s21 = int_to_ptr.vmem [resolvable:$true] %s20
      %26 = dma.hbm_to_vmem [thread:$0]  %s0, 896, %s21, [#allocation4], 896, 896, 56
    $region5: #{tpu_custom_call.1} parent=1 // pred_fallthru
      _
    // Predicated region
    $region6: #{tpu_custom_call.1} parent=1 // pred_check
      _
    $region7: #{tpu_custom_call.1} parent=1 // pred_check_branch
      %28 = sbr.rel (0) target = $region9
    $region8: #{tpu_custom_call.1} parent=1 // pred_region
      %s30 = ssub.s32 12544, 12544
      %31 = vsyncadd [#allocation7], %s30
      %s32 = sshll.u32 [#allocation6], 4
      %s33 = int_to_ptr.vmem [resolvable:$true] %s32
      %38 = dma.hbm_to_vmem [thread:$0]  %s1, 12544, %s33, [#allocation7], 128, 128, 8
    $region9: #{tpu_custom_call.1} parent=1 // pred_fallthru
      _
    // Predicated region
    $region10: #{tpu_custom_call.1} parent=1 // pred_check
      _
    $region11: #{tpu_custom_call.1} parent=1 // pred_check_branch
      %40 = sbr.rel (0) target = $region13
    $region12: #{tpu_custom_call.1} parent=1 // pred_region
      _
    $region13: #{tpu_custom_call.1} parent=1 // pred_fallthru
      _
    // Predicated region
    $region14: #{tpu_custom_call.1} parent=1 // pred_check
      _
    $region15: #{tpu_custom_call.1} parent=1 // pred_check_branch
      %42 = sbr.rel (0) target = $region17
    $region16: #{tpu_custom_call.1} parent=1 // pred_region
      _
    $region17: #{tpu_custom_call.1} parent=1 // pred_fallthru
      _
    // Predicated region
    $region18: #{tpu_custom_call.1} parent=1 // pred_check
      _
    $region19: #{tpu_custom_call.1} parent=1 // pred_check_branch
      %44 = sbr.rel (0) target = $region21
    $region20: #{tpu_custom_call.1} parent=1 // pred_region
      _
    $region21: #{tpu_custom_call.1} parent=1 // pred_fallthru
      _
    // Predicated region
    $region22: #{tpu_custom_call.1} parent=1 // pred_check
      _
    $region23: #{tpu_custom_call.1} parent=1 // pred_check_branch
      %46 = sbr.rel (0) target = $region25
    $region24: #{tpu_custom_call.1} parent=1 // pred_region
      %47 = dma.done [#allocation4], 14336
    $region25: #{tpu_custom_call.1} parent=1 // pred_fallthru
      _
    // Predicated region
    $region26: #{tpu_custom_call.1} parent=1 // pred_check
      _
    $region27: #{tpu_custom_call.1} parent=1 // pred_check_branch
      %49 = sbr.rel (0) target = $region29
    $region28: #{tpu_custom_call.1} parent=1 // pred_region
      %50 = dma.done [#allocation7], 12544
    $region29: #{tpu_custom_call.1} parent=1 // pred_fallthru
      _
    %v51 = vld [vmem:[#allocation3] sm:$0xff]
    %v52 = vld [vmem:[#allocation3 + $0x8] sm:$0xff]
    %v53 = vld [vmem:[#allocation3 + $0x10] sm:$0xff]
    %v54 = vld [vmem:[#allocation3 + $0x18] sm:$0xff]
    %v55 = vld [vmem:[#allocation3 + $0x20] sm:$0xff]
    %v56 = vld [vmem:[#allocation3 + $0x28] sm:$0xff]
    %v57 = vld [vmem:[#allocation3 + $0x30] sm:$0xff]
    %v58 = vld [vmem:[#allocation3 + $0x38] sm:$0xff]
    %v59 = vld [vmem:[#allocation3 + $0x40] sm:$0xff]
    %v60 = vld [vmem:[#allocation3 + $0x48] sm:$0xff]
    %v61 = vld [vmem:[#allocation3 + $0x50] sm:$0xff]
    %v62 = vld [vmem:[#allocation3 + $0x58] sm:$0xff]
    %v63 = vld [vmem:[#allocation3 + $0x60] sm:$0xff]
    %v64 = vld [vmem:[#allocation3 + $0x68] sm:$0xff]
    %v65 = vld [vmem:[#allocation3 + $0x70] sm:$0xff]
    %v66 = vld [vmem:[#allocation3 + $0x78] sm:$0xff]
    %v67 = vld [vmem:[#allocation3 + $0x80] sm:$0xff]
    %v68 = vld [vmem:[#allocation3 + $0x88] sm:$0xff]
    %v69 = vld [vmem:[#allocation3 + $0x90] sm:$0xff]
    %v70 = vld [vmem:[#allocation3 + $0x98] sm:$0xff]
    %v71 = vld [vmem:[#allocation3 + $0xa0] sm:$0xff]
    %v72 = vld [vmem:[#allocation3 + $0xa8] sm:$0xff]
    %v73 = vld [vmem:[#allocation3 + $0xb0] sm:$0xff]
    %v74 = vld [vmem:[#allocation3 + $0xb8] sm:$0xff]
    %v75 = vld [vmem:[#allocation3 + $0xc0] sm:$0xff]
    %v76 = vld [vmem:[#allocation3 + $0xc8] sm:$0xff]
    %v77 = vld [vmem:[#allocation3 + $0xd0] sm:$0xff]
    %v78 = vld [vmem:[#allocation3 + $0xd8] sm:$0xff]
    %v79 = vld [vmem:[#allocation3 + $0xe0] sm:$0xff]
    %v80 = vld [vmem:[#allocation3 + $0xe8] sm:$0xff]
    %v81 = vld [vmem:[#allocation3 + $0xf0] sm:$0xff]
    %v82 = vld [vmem:[#allocation3 + $0xf8] sm:$0xff]
    %v83 = vld [vmem:[#allocation3 + $0x100] sm:$0xff]
    %v84 = vld [vmem:[#allocation3 + $0x108] sm:$0xff]
    %v85 = vld [vmem:[#allocation3 + $0x110] sm:$0xff]
    %v86 = vld [vmem:[#allocation3 + $0x118] sm:$0xff]
    %v87 = vld [vmem:[#allocation3 + $0x120] sm:$0xff]
    %v88 = vld [vmem:[#allocation3 + $0x128] sm:$0xff]
    %v89 = vld [vmem:[#allocation3 + $0x130] sm:$0xff]
    %v90 = vld [vmem:[#allocation3 + $0x138] sm:$0xff]
    %v91 = vld [vmem:[#allocation3 + $0x140] sm:$0xff]
    %v92 = vld [vmem:[#allocation3 + $0x148] sm:$0xff]
    %v93 = vld [vmem:[#allocation3 + $0x150] sm:$0xff]
    %v94 = vld [vmem:[#allocation3 + $0x158] sm:$0xff]
    %v95 = vld [vmem:[#allocation3 + $0x160] sm:$0xff]
    %v96 = vld [vmem:[#allocation3 + $0x168] sm:$0xff]
    %v97 = vld [vmem:[#allocation3 + $0x170] sm:$0xff]
    %v98 = vld [vmem:[#allocation3 + $0x178] sm:$0xff]
    %v99 = vld [vmem:[#allocation3 + $0x180] sm:$0xff]
    %v100 = vld [vmem:[#allocation3 + $0x188] sm:$0xff]
    %v101 = vld [vmem:[#allocation3 + $0x190] sm:$0xff]
    %v102 = vld [vmem:[#allocation3 + $0x198] sm:$0xff]
    %v103 = vld [vmem:[#allocation3 + $0x1a0] sm:$0xff]
    %v104 = vld [vmem:[#allocation3 + $0x1a8] sm:$0xff]
    %v105 = vld [vmem:[#allocation3 + $0x1b0] sm:$0xff]
    %v106 = vld [vmem:[#allocation3 + $0x1b8] sm:$0xff]
    %v107 = vld [vmem:[#allocation3 + $0x1c0] sm:$0xff]
    %v108 = vld [vmem:[#allocation3 + $0x1c8] sm:$0xff]
    %v109 = vld [vmem:[#allocation3 + $0x1d0] sm:$0xff]
    %v110 = vld [vmem:[#allocation3 + $0x1d8] sm:$0xff]
    %v111 = vld [vmem:[#allocation3 + $0x1e0] sm:$0xff]
    %v112 = vld [vmem:[#allocation3 + $0x1e8] sm:$0xff]
    %v113 = vld [vmem:[#allocation3 + $0x1f0] sm:$0xff]
    %v114 = vld [vmem:[#allocation3 + $0x1f8] sm:$0xff]
    %v115 = vld [vmem:[#allocation3 + $0x200] sm:$0xff]
    %v116 = vld [vmem:[#allocation3 + $0x208] sm:$0xff]
    %v117 = vld [vmem:[#allocation3 + $0x210] sm:$0xff]
    %v118 = vld [vmem:[#allocation3 + $0x218] sm:$0xff]
    %v119 = vld [vmem:[#allocation3 + $0x220] sm:$0xff]
    %v120 = vld [vmem:[#allocation3 + $0x228] sm:$0xff]
    %v121 = vld [vmem:[#allocation3 + $0x230] sm:$0xff]
    %v122 = vld [vmem:[#allocation3 + $0x238] sm:$0xff]
    %v123 = vld [vmem:[#allocation3 + $0x240] sm:$0xff]
    %v124 = vld [vmem:[#allocation3 + $0x248] sm:$0xff]
    %v125 = vld [vmem:[#allocation3 + $0x250] sm:$0xff]
    %v126 = vld [vmem:[#allocation3 + $0x258] sm:$0xff]
    %v127 = vld [vmem:[#allocation3 + $0x260] sm:$0xff]
    %v128 = vld [vmem:[#allocation3 + $0x268] sm:$0xff]
    %v129 = vld [vmem:[#allocation3 + $0x270] sm:$0xff]
    %v130 = vld [vmem:[#allocation3 + $0x278] sm:$0xff]
    %v131 = vld [vmem:[#allocation3 + $0x280] sm:$0xff]
    %v132 = vld [vmem:[#allocation3 + $0x288] sm:$0xff]
    %v133 = vld [vmem:[#allocation3 + $0x290] sm:$0xff]
    %v134 = vld [vmem:[#allocation3 + $0x298] sm:$0xff]
    %v135 = vld [vmem:[#allocation3 + $0x2a0] sm:$0xff]
    %v136 = vld [vmem:[#allocation3 + $0x2a8] sm:$0xff]
    %v137 = vld [vmem:[#allocation3 + $0x2b0] sm:$0xff]
    %v138 = vld [vmem:[#allocation3 + $0x2b8] sm:$0xff]
    %v139 = vld [vmem:[#allocation3 + $0x2c0] sm:$0xff]
    %v140 = vld [vmem:[#allocation3 + $0x2c8] sm:$0xff]
    %v141 = vld [vmem:[#allocation3 + $0x2d0] sm:$0xff]
    %v142 = vld [vmem:[#allocation3 + $0x2d8] sm:$0xff]
    %v143 = vld [vmem:[#allocation3 + $0x2e0] sm:$0xff]
    %v144 = vld [vmem:[#allocation3 + $0x2e8] sm:$0xff]
    %v145 = vld [vmem:[#allocation3 + $0x2f0] sm:$0xff]
    %v146 = vld [vmem:[#allocation3 + $0x2f8] sm:$0xff]
    %v147 = vld [vmem:[#allocation3 + $0x300] sm:$0xff]
    %v148 = vld [vmem:[#allocation3 + $0x308] sm:$0xff]
    %v149 = vld [vmem:[#allocation3 + $0x310] sm:$0xff]
    %v150 = vld [vmem:[#allocation3 + $0x318] sm:$0xff]
    %v151 = vld [vmem:[#allocation3 + $0x320] sm:$0xff]
    %v152 = vld [vmem:[#allocation3 + $0x328] sm:$0xff]
    %v153 = vld [vmem:[#allocation3 + $0x330] sm:$0xff]
    %v154 = vld [vmem:[#allocation3 + $0x338] sm:$0xff]
    %v155 = vld [vmem:[#allocation3 + $0x340] sm:$0xff]
    %v156 = vld [vmem:[#allocation3 + $0x348] sm:$0xff]
    %v157 = vld [vmem:[#allocation3 + $0x350] sm:$0xff]
    %v158 = vld [vmem:[#allocation3 + $0x358] sm:$0xff]
    %v159 = vld [vmem:[#allocation3 + $0x360] sm:$0xff]
    %v160 = vld [vmem:[#allocation3 + $0x368] sm:$0xff]
    %v161 = vld [vmem:[#allocation3 + $0x370] sm:$0xff]
    %v162 = vld [vmem:[#allocation3 + $0x378] sm:$0xff]
    %v163 = vld [vmem:[#allocation6] sm:$0xff]
    %v164 = vld [vmem:[#allocation6 + $0x8] sm:$0xff]
    %v165 = vld [vmem:[#allocation6 + $0x10] sm:$0xff]
    %v166 = vld [vmem:[#allocation6 + $0x18] sm:$0xff]
    %v167 = vld [vmem:[#allocation6 + $0x20] sm:$0xff]
    %v168 = vld [vmem:[#allocation6 + $0x28] sm:$0xff]
    %v169 = vld [vmem:[#allocation6 + $0x30] sm:$0xff]
    %v170 = vld [vmem:[#allocation6 + $0x38] sm:$0xff]
    %v171 = vld [vmem:[#allocation6 + $0x40] sm:$0xff]
    %v172 = vld [vmem:[#allocation6 + $0x48] sm:$0xff]
    %v173 = vld [vmem:[#allocation6 + $0x50] sm:$0xff]
    %v174 = vld [vmem:[#allocation6 + $0x58] sm:$0xff]
    %v175 = vld [vmem:[#allocation6 + $0x60] sm:$0xff]
    %v176 = vld [vmem:[#allocation6 + $0x68] sm:$0xff]
    %v177 = vld [vmem:[#allocation6 + $0x70] sm:$0xff]
    %v178 = vld [vmem:[#allocation6 + $0x78] sm:$0xff]
    %v179 = vld [vmem:[#allocation6 + $0x80] sm:$0xff]
    %v180 = vld [vmem:[#allocation6 + $0x88] sm:$0xff]
    %v181 = vld [vmem:[#allocation6 + $0x90] sm:$0xff]
    %v182 = vld [vmem:[#allocation6 + $0x98] sm:$0xff]
    %v183 = vld [vmem:[#allocation6 + $0xa0] sm:$0xff]
    %v184 = vld [vmem:[#allocation6 + $0xa8] sm:$0xff]
    %v185 = vld [vmem:[#allocation6 + $0xb0] sm:$0xff]
    %v186 = vld [vmem:[#allocation6 + $0xb8] sm:$0xff]
    %v187 = vld [vmem:[#allocation6 + $0xc0] sm:$0xff]
    %v188 = vld [vmem:[#allocation6 + $0xc8] sm:$0xff]
    %v189 = vld [vmem:[#allocation6 + $0xd0] sm:$0xff]
    %v190 = vld [vmem:[#allocation6 + $0xd8] sm:$0xff]
    %v191 = vld [vmem:[#allocation6 + $0xe0] sm:$0xff]
    %v192 = vld [vmem:[#allocation6 + $0xe8] sm:$0xff]
    %v193 = vld [vmem:[#allocation6 + $0xf0] sm:$0xff]
    %v194 = vld [vmem:[#allocation6 + $0xf8] sm:$0xff]
    %v195 = vld [vmem:[#allocation6 + $0x100] sm:$0xff]
    %v196 = vld [vmem:[#allocation6 + $0x108] sm:$0xff]
    %v197 = vld [vmem:[#allocation6 + $0x110] sm:$0xff]
    %v198 = vld [vmem:[#allocation6 + $0x118] sm:$0xff]
    %v199 = vld [vmem:[#allocation6 + $0x120] sm:$0xff]
    %v200 = vld [vmem:[#allocation6 + $0x128] sm:$0xff]
    %v201 = vld [vmem:[#allocation6 + $0x130] sm:$0xff]
    %v202 = vld [vmem:[#allocation6 + $0x138] sm:$0xff]
    %v203 = vld [vmem:[#allocation6 + $0x140] sm:$0xff]
    %v204 = vld [vmem:[#allocation6 + $0x148] sm:$0xff]
    %v205 = vld [vmem:[#allocation6 + $0x150] sm:$0xff]
    %v206 = vld [vmem:[#allocation6 + $0x158] sm:$0xff]
    %v207 = vld [vmem:[#allocation6 + $0x160] sm:$0xff]
    %v208 = vld [vmem:[#allocation6 + $0x168] sm:$0xff]
    %v209 = vld [vmem:[#allocation6 + $0x170] sm:$0xff]
    %v210 = vld [vmem:[#allocation6 + $0x178] sm:$0xff]
    %v211 = vld [vmem:[#allocation6 + $0x180] sm:$0xff]
    %v212 = vld [vmem:[#allocation6 + $0x188] sm:$0xff]
    %v213 = vld [vmem:[#allocation6 + $0x190] sm:$0xff]
    %v214 = vld [vmem:[#allocation6 + $0x198] sm:$0xff]
    %v215 = vld [vmem:[#allocation6 + $0x1a0] sm:$0xff]
    %v216 = vld [vmem:[#allocation6 + $0x1a8] sm:$0xff]
    %v217 = vld [vmem:[#allocation6 + $0x1b0] sm:$0xff]
    %v218 = vld [vmem:[#allocation6 + $0x1b8] sm:$0xff]
    %v219 = vld [vmem:[#allocation6 + $0x1c0] sm:$0xff]
    %v220 = vld [vmem:[#allocation6 + $0x1c8] sm:$0xff]
    %v221 = vld [vmem:[#allocation6 + $0x1d0] sm:$0xff]
    %v222 = vld [vmem:[#allocation6 + $0x1d8] sm:$0xff]
    %v223 = vld [vmem:[#allocation6 + $0x1e0] sm:$0xff]
    %v224 = vld [vmem:[#allocation6 + $0x1e8] sm:$0xff]
    %v225 = vld [vmem:[#allocation6 + $0x1f0] sm:$0xff]
    %v226 = vld [vmem:[#allocation6 + $0x1f8] sm:$0xff]
    %v227 = vld [vmem:[#allocation6 + $0x200] sm:$0xff]
    %v228 = vld [vmem:[#allocation6 + $0x208] sm:$0xff]
    %v229 = vld [vmem:[#allocation6 + $0x210] sm:$0xff]
    %v230 = vld [vmem:[#allocation6 + $0x218] sm:$0xff]
    %v231 = vld [vmem:[#allocation6 + $0x220] sm:$0xff]
    %v232 = vld [vmem:[#allocation6 + $0x228] sm:$0xff]
    %v233 = vld [vmem:[#allocation6 + $0x230] sm:$0xff]
    %v234 = vld [vmem:[#allocation6 + $0x238] sm:$0xff]
    %v235 = vld [vmem:[#allocation6 + $0x240] sm:$0xff]
    %v236 = vld [vmem:[#allocation6 + $0x248] sm:$0xff]
    %v237 = vld [vmem:[#allocation6 + $0x250] sm:$0xff]
    %v238 = vld [vmem:[#allocation6 + $0x258] sm:$0xff]
    %v239 = vld [vmem:[#allocation6 + $0x260] sm:$0xff]
    %v240 = vld [vmem:[#allocation6 + $0x268] sm:$0xff]
    %v241 = vld [vmem:[#allocation6 + $0x270] sm:$0xff]
    %v242 = vld [vmem:[#allocation6 + $0x278] sm:$0xff]
    %v243 = vld [vmem:[#allocation6 + $0x280] sm:$0xff]
    %v244 = vld [vmem:[#allocation6 + $0x288] sm:$0xff]
    %v245 = vld [vmem:[#allocation6 + $0x290] sm:$0xff]
    %v246 = vld [vmem:[#allocation6 + $0x298] sm:$0xff]
    %v247 = vld [vmem:[#allocation6 + $0x2a0] sm:$0xff]
    %v248 = vld [vmem:[#allocation6 + $0x2a8] sm:$0xff]
    %v249 = vld [vmem:[#allocation6 + $0x2b0] sm:$0xff]
    %v250 = vld [vmem:[#allocation6 + $0x2b8] sm:$0xff]
    %v251 = vld [vmem:[#allocation6 + $0x2c0] sm:$0xff]
    %v252 = vld [vmem:[#allocation6 + $0x2c8] sm:$0xff]
    %v253 = vld [vmem:[#allocation6 + $0x2d0] sm:$0xff]
    %v254 = vld [vmem:[#allocation6 + $0x2d8] sm:$0xff]
    %v255 = vld [vmem:[#allocation6 + $0x2e0] sm:$0xff]
    %v256 = vld [vmem:[#allocation6 + $0x2e8] sm:$0xff]
    %v257 = vld [vmem:[#allocation6 + $0x2f0] sm:$0xff]
    %v258 = vld [vmem:[#allocation6 + $0x2f8] sm:$0xff]
    %v259 = vld [vmem:[#allocation6 + $0x300] sm:$0xff]
    %v260 = vld [vmem:[#allocation6 + $0x308] sm:$0xff]
    %v261 = vld [vmem:[%s2] sm:$0x1]
    %v263 = vlaneseq
    %v264 = vshrl.u32 %v263, 7
    %v265 = vsub.s32 0, %v264
    %v266 = vrot.slane %v261, %v265
    %vm268 = vcmask 130048
    %v270 = vsel %vm268, %v57, 0
    %v273 = vsel %vm268, %v64, 0
    %v276 = vsel %vm268, %v71, 0
    %v279 = vsel %vm268, %v78, 0
    %v282 = vsel %vm268, %v85, 0
    %v285 = vsel %vm268, %v92, 0
    %v288 = vsel %vm268, %v99, 0
    %v291 = vsel %vm268, %v106, 0
    %v294 = vsel %vm268, %v113, 0
    %v297 = vsel %vm268, %v120, 0
    %v300 = vsel %vm268, %v127, 0
    %v303 = vsel %vm268, %v134, 0
    %v306 = vsel %vm268, %v141, 0
    %v309 = vsel %vm268, %v148, 0
    %v312 = vsel %vm268, %v155, 0
    %v315 = vsel %vm268, %v162, 0
    %317 = vmatprep.subr.mxu0 0.0
    %318 = vmatpush1.msra.mxu0 %v163
    %319 = vmatprep.subr.mxu0 0.0
    %320 = vmatpush1.msra.mxu0 %v164
    %321 = vmatprep.subr.mxu0 0.0
    %322 = vmatpush1.msra.mxu0 %v165
    %323 = vmatprep.subr.mxu0 0.0
    %324 = vmatpush1.msra.mxu0 %v166
    %325 = vmatprep.subr.mxu0 0.0
    %326 = vmatpush1.msra.mxu0 %v167
    %327 = vmatprep.subr.mxu0 0.0
    %328 = vmatpush1.msra.mxu0 %v168
    %329 = vmatprep.subr.mxu0 0.0
    %330 = vmatpush1.msra.mxu0 %v169
    %331 = vmatprep.subr.mxu0 0.0
    %332 = vmatpush1.msra.mxu0 %v170
    %333 = vmatprep.subr.mxu0 0.0
    %334 = vmatpush1.msra.mxu0 %v171
    %335 = vmatprep.subr.mxu0 0.0
    %336 = vmatpush1.msra.mxu0 %v172
    %337 = vmatprep.subr.mxu0 0.0
    %338 = vmatpush1.msra.mxu0 %v173
    %339 = vmatprep.subr.mxu0 0.0
    %340 = vmatpush1.msra.mxu0 %v174
    %341 = vmatprep.subr.mxu0 0.0
    %342 = vmatpush1.msra.mxu0 %v175
    %343 = vmatprep.subr.mxu0 0.0
    %344 = vmatpush1.msra.mxu0 %v176
    %345 = vmatprep.subr.mxu0 0.0
    %346 = vmatpush1.msra.mxu0 %v177
    %347 = vmatprep.subr.mxu0 0.0
    %348 = vmatpush1.msra.mxu0 %v178
    %349 = vmatprep.subr.mxu0 0.0
    %350 = vmatpush1.msra.mxu0 %v179
    %351 = vmatprep.subr.mxu0 0.0
    %352 = vmatpush1.msra.mxu0 %v180
    %353 = vmatprep.subr.mxu0 0.0
    %354 = vmatpush1.msra.mxu0 %v181
    %355 = vmatprep.subr.mxu0 0.0
    %356 = vmatpush1.msra.mxu0 %v182
    %357 = vmatprep.subr.mxu0 0.0
    %358 = vmatpush1.msra.mxu0 %v183
    %359 = vmatprep.subr.mxu0 0.0
    %360 = vmatpush1.msra.mxu0 %v184
    %361 = vmatprep.subr.mxu0 0.0
    %362 = vmatpush1.msra.mxu0 %v185
    %363 = vmatprep.subr.mxu0 0.0
    %364 = vmatpush1.msra.mxu0 %v186
    %365 = vmatprep.subr.mxu0 0.0
    %366 = vmatpush1.msra.mxu0 %v187
    %367 = vmatprep.subr.mxu0 0.0
    %368 = vmatpush1.msra.mxu0 %v188
    %369 = vmatprep.subr.mxu0 0.0
    %370 = vmatpush1.msra.mxu0 %v189
    %371 = vmatprep.subr.mxu0 0.0
    %372 = vmatpush1.msra.mxu0 %v190
    %373 = vmatprep.subr.mxu0 0.0
    %374 = vmatpush1.msra.mxu0 %v191
    %375 = vmatprep.subr.mxu0 0.0
    %376 = vmatpush1.msra.mxu0 %v192
    %377 = vmatprep.subr.mxu0 0.0
    %378 = vmatpush1.msra.mxu0 %v193
    %379 = vmatprep.subr.mxu0 0.0
    %380 = vmatpush1.msra.mxu0 %v194
    %381 = vmatprep.mubr.f32.mxu0 %v52
    %382 = vmatmul.mubr.f32.gmra.mrb[0].mxu0 %v51
    %v383 = vpop.f32.mrb[0].mxu0
    %v384 = vadd.f32 %v266, %v383
    %v385 = vpop.f32.mrb[0].mxu0
    %386 = vmatprep.mubr.f32.mxu0 %v59
    %387 = vmatmul.mubr.f32.gmra.mrb[0].mxu0 %v58
    %v388 = vpop.f32.mrb[0].mxu0
    %v389 = vadd.f32 %v266, %v388
    %v390 = vpop.f32.mrb[0].mxu0
    %391 = vmatprep.mubr.f32.mxu0 %v66
    %392 = vmatmul.mubr.f32.gmra.mrb[0].mxu0 %v65
    %v393 = vpop.f32.mrb[0].mxu0
    %v394 = vadd.f32 %v266, %v393
    %v395 = vpop.f32.mrb[0].mxu0
    %396 = vmatprep.mubr.f32.mxu0 %v73
    %397 = vmatmul.mubr.f32.gmra.mrb[0].mxu0 %v72
    %v398 = vpop.f32.mrb[0].mxu0
    %v399 = vadd.f32 %v266, %v398
    %v400 = vpop.f32.mrb[0].mxu0
    %401 = vmatprep.mubr.f32.mxu0 %v80
    %402 = vmatmul.mubr.f32.gmra.mrb[0].mxu0 %v79
    %v403 = vpop.f32.mrb[0].mxu0
    %v404 = vadd.f32 %v266, %v403
    %v405 = vpop.f32.mrb[0].mxu0
    %406 = vmatprep.mubr.f32.mxu0 %v87
    %407 = vmatmul.mubr.f32.gmra.mrb[0].mxu0 %v86
    %v408 = vpop.f32.mrb[0].mxu0
    %v409 = vadd.f32 %v266, %v408
    %v410 = vpop.f32.mrb[0].mxu0
    %411 = vmatprep.mubr.f32.mxu0 %v94
    %412 = vmatmul.mubr.f32.gmra.mrb[0].mxu0 %v93
    %v413 = vpop.f32.mrb[0].mxu0
    %v414 = vadd.f32 %v266, %v413
    %v415 = vpop.f32.mrb[0].mxu0
    %416 = vmatprep.mubr.f32.mxu0 %v101
    %417 = vmatmul.mubr.f32.gmra.mrb[0].mxu0 %v100
    %v418 = vpop.f32.mrb[0].mxu0
    %v419 = vadd.f32 %v266, %v418
    %v420 = vpop.f32.mrb[0].mxu0
    %421 = vmatprep.mubr.f32.mxu0 %v108
    %422 = vmatmul.mubr.f32.gmra.mrb[0].mxu0 %v107
    %v423 = vpop.f32.mrb[0].mxu0
    %v424 = vadd.f32 %v266, %v423
    %v425 = vpop.f32.mrb[0].mxu0
    %426 = vmatprep.mubr.f32.mxu0 %v115
    %427 = vmatmul.mubr.f32.gmra.mrb[0].mxu0 %v114
    %v428 = vpop.f32.mrb[0].mxu0
    %v429 = vadd.f32 %v266, %v428
    %v430 = vpop.f32.mrb[0].mxu0
    %431 = vmatprep.mubr.f32.mxu0 %v122
    %432 = vmatmul.mubr.f32.gmra.mrb[0].mxu0 %v121
    %v433 = vpop.f32.mrb[0].mxu0
    %v434 = vadd.f32 %v266, %v433
    %v435 = vpop.f32.mrb[0].mxu0
    %436 = vmatprep.mubr.f32.mxu0 %v129
    %437 = vmatmul.mubr.f32.gmra.mrb[0].mxu0 %v128
    %v438 = vpop.f32.mrb[0].mxu0
    %v439 = vadd.f32 %v266, %v438
    %v440 = vpop.f32.mrb[0].mxu0
    %441 = vmatprep.mubr.f32.mxu0 %v136
    %442 = vmatmul.mubr.f32.gmra.mrb[0].mxu0 %v135
    %v443 = vpop.f32.mrb[0].mxu0
    %v444 = vadd.f32 %v266, %v443
    %v445 = vpop.f32.mrb[0].mxu0
    %446 = vmatprep.mubr.f32.mxu0 %v143
    %447 = vmatmul.mubr.f32.gmra.mrb[0].mxu0 %v142
    %v448 = vpop.f32.mrb[0].mxu0
    %v449 = vadd.f32 %v266, %v448
    %v450 = vpop.f32.mrb[0].mxu0
    %451 = vmatprep.mubr.f32.mxu0 %v150
    %452 = vmatmul.mubr.f32.gmra.mrb[0].mxu0 %v149
    %v453 = vpop.f32.mrb[0].mxu0
    %v454 = vadd.f32 %v266, %v453
    %v455 = vpop.f32.mrb[0].mxu0
    %456 = vmatprep.mubr.f32.mxu0 %v157
    %457 = vmatmul.mubr.f32.gmra.mrb[0].mxu0 %v156
    %v458 = vpop.f32.mrb[0].mxu0
    %v459 = vadd.f32 %v266, %v458
    %v460 = vpop.f32.mrb[0].mxu0
    %461 = vdwg.mxu0
    %462 = vmatprep.subr.mxu0 0.0
    %463 = vmatpush1.msra.mxu0 %v195
    %464 = vmatprep.subr.mxu0 0.0
    %465 = vmatpush1.msra.mxu0 %v196
    %466 = vmatprep.subr.mxu0 0.0
    %467 = vmatpush1.msra.mxu0 %v197
    %468 = vmatprep.subr.mxu0 0.0
    %469 = vmatpush1.msra.mxu0 %v198
    %470 = vmatprep.subr.mxu0 0.0
    %471 = vmatpush1.msra.mxu0 %v199
    %472 = vmatprep.subr.mxu0 0.0
    %473 = vmatpush1.msra.mxu0 %v200
    %474 = vmatprep.subr.mxu0 0.0
    %475 = vmatpush1.msra.mxu0 %v201
    %476 = vmatprep.subr.mxu0 0.0
    %477 = vmatpush1.msra.mxu0 %v202
    %478 = vmatprep.subr.mxu0 0.0
    %479 = vmatpush1.msra.mxu0 %v203
    %480 = vmatprep.subr.mxu0 0.0
    %481 = vmatpush1.msra.mxu0 %v204
    %482 = vmatprep.subr.mxu0 0.0
    %483 = vmatpush1.msra.mxu0 %v205
    %484 = vmatprep.subr.mxu0 0.0
    %485 = vmatpush1.msra.mxu0 %v206
    %486 = vmatprep.subr.mxu0 0.0
    %487 = vmatpush1.msra.mxu0 %v207
    %488 = vmatprep.subr.mxu0 0.0
    %489 = vmatpush1.msra.mxu0 %v208
    %490 = vmatprep.subr.mxu0 0.0
    %491 = vmatpush1.msra.mxu0 %v209
    %492 = vmatprep.subr.mxu0 0.0
    %493 = vmatpush1.msra.mxu0 %v210
    %494 = vmatprep.subr.mxu0 0.0
    %495 = vmatpush1.msra.mxu0 %v211
    %496 = vmatprep.subr.mxu0 0.0
    %497 = vmatpush1.msra.mxu0 %v212
    %498 = vmatprep.subr.mxu0 0.0
    %499 = vmatpush1.msra.mxu0 %v213
    %500 = vmatprep.subr.mxu0 0.0
    %501 = vmatpush1.msra.mxu0 %v214
    %502 = vmatprep.subr.mxu0 0.0
    %503 = vmatpush1.msra.mxu0 %v215
    %504 = vmatprep.subr.mxu0 0.0
    %505 = vmatpush1.msra.mxu0 %v216
    %506 = vmatprep.subr.mxu0 0.0
    %507 = vmatpush1.msra.mxu0 %v217
    %508 = vmatprep.subr.mxu0 0.0
    %509 = vmatpush1.msra.mxu0 %v218
    %510 = vmatprep.subr.mxu0 0.0
    %511 = vmatpush1.msra.mxu0 %v219
    %512 = vmatprep.subr.mxu0 0.0
    %513 = vmatpush1.msra.mxu0 %v220
    %514 = vmatprep.subr.mxu0 0.0
    %515 = vmatpush1.msra.mxu0 %v221
    %516 = vmatprep.subr.mxu0 0.0
    %517 = vmatpush1.msra.mxu0 %v222
    %518 = vmatprep.subr.mxu0 0.0
    %519 = vmatpush1.msra.mxu0 %v223
    %520 = vmatprep.subr.mxu0 0.0
    %521 = vmatpush1.msra.mxu0 %v224
    %522 = vmatprep.subr.mxu0 0.0
    %523 = vmatpush1.msra.mxu0 %v225
    %524 = vmatprep.subr.mxu0 0.0
    %525 = vmatpush1.msra.mxu0 %v226
    %526 = vmatprep.mubr.f32.mxu0 %v54
    %527 = vmatmul.mubr.f32.gmra.mrb[0].mxu0 %v53
    %v528 = vpop.f32.mrb[0].mxu0
    %v529 = vadd.f32 %v384, %v528
    %v530 = vpop.f32.mrb[0].mxu0
    %531 = vmatprep.mubr.f32.mxu0 %v61
    %532 = vmatmul.mubr.f32.gmra.mrb[0].mxu0 %v60
    %v533 = vpop.f32.mrb[0].mxu0
    %v534 = vadd.f32 %v389, %v533
    %v535 = vpop.f32.mrb[0].mxu0
    %536 = vmatprep.mubr.f32.mxu0 %v68
    %537 = vmatmul.mubr.f32.gmra.mrb[0].mxu0 %v67
    %v538 = vpop.f32.mrb[0].mxu0
    %v539 = vadd.f32 %v394, %v538
    %v540 = vpop.f32.mrb[0].mxu0
    %541 = vmatprep.mubr.f32.mxu0 %v75
    %542 = vmatmul.mubr.f32.gmra.mrb[0].mxu0 %v74
    %v543 = vpop.f32.mrb[0].mxu0
    %v544 = vadd.f32 %v399, %v543
    %v545 = vpop.f32.mrb[0].mxu0
    %546 = vmatprep.mubr.f32.mxu0 %v82
    %547 = vmatmul.mubr.f32.gmra.mrb[0].mxu0 %v81
    %v548 = vpop.f32.mrb[0].mxu0
    %v549 = vadd.f32 %v404, %v548
    %v550 = vpop.f32.mrb[0].mxu0
    %551 = vmatprep.mubr.f32.mxu0 %v89
    %552 = vmatmul.mubr.f32.gmra.mrb[0].mxu0 %v88
    %v553 = vpop.f32.mrb[0].mxu0
    %v554 = vadd.f32 %v409, %v553
    %v555 = vpop.f32.mrb[0].mxu0
    %556 = vmatprep.mubr.f32.mxu0 %v96
    %557 = vmatmul.mubr.f32.gmra.mrb[0].mxu0 %v95
    %v558 = vpop.f32.mrb[0].mxu0
    %v559 = vadd.f32 %v414, %v558
    %v560 = vpop.f32.mrb[0].mxu0
    %561 = vmatprep.mubr.f32.mxu0 %v103
    %562 = vmatmul.mubr.f32.gmra.mrb[0].mxu0 %v102
    %v563 = vpop.f32.mrb[0].mxu0
    %v564 = vadd.f32 %v419, %v563
    %v565 = vpop.f32.mrb[0].mxu0
    %566 = vmatprep.mubr.f32.mxu0 %v110
    %567 = vmatmul.mubr.f32.gmra.mrb[0].mxu0 %v109
    %v568 = vpop.f32.mrb[0].mxu0
    %v569 = vadd.f32 %v424, %v568
    %v570 = vpop.f32.mrb[0].mxu0
    %571 = vmatprep.mubr.f32.mxu0 %v117
    %572 = vmatmul.mubr.f32.gmra.mrb[0].mxu0 %v116
    %v573 = vpop.f32.mrb[0].mxu0
    %v574 = vadd.f32 %v429, %v573
    %v575 = vpop.f32.mrb[0].mxu0
    %576 = vmatprep.mubr.f32.mxu0 %v124
    %577 = vmatmul.mubr.f32.gmra.mrb[0].mxu0 %v123
    %v578 = vpop.f32.mrb[0].mxu0
    %v579 = vadd.f32 %v434, %v578
    %v580 = vpop.f32.mrb[0].mxu0
    %581 = vmatprep.mubr.f32.mxu0 %v131
    %582 = vmatmul.mubr.f32.gmra.mrb[0].mxu0 %v130
    %v583 = vpop.f32.mrb[0].mxu0
    %v584 = vadd.f32 %v439, %v583
    %v585 = vpop.f32.mrb[0].mxu0
    %586 = vmatprep.mubr.f32.mxu0 %v138
    %587 = vmatmul.mubr.f32.gmra.mrb[0].mxu0 %v137
    %v588 = vpop.f32.mrb[0].mxu0
    %v589 = vadd.f32 %v444, %v588
    %v590 = vpop.f32.mrb[0].mxu0
    %591 = vmatprep.mubr.f32.mxu0 %v145
    %592 = vmatmul.mubr.f32.gmra.mrb[0].mxu0 %v144
    %v593 = vpop.f32.mrb[0].mxu0
    %v594 = vadd.f32 %v449, %v593
    %v595 = vpop.f32.mrb[0].mxu0
    %596 = vmatprep.mubr.f32.mxu0 %v152
    %597 = vmatmul.mubr.f32.gmra.mrb[0].mxu0 %v151
    %v598 = vpop.f32.mrb[0].mxu0
    %v599 = vadd.f32 %v454, %v598
    %v600 = vpop.f32.mrb[0].mxu0
    %601 = vmatprep.mubr.f32.mxu0 %v159
    %602 = vmatmul.mubr.f32.gmra.mrb[0].mxu0 %v158
    %v603 = vpop.f32.mrb[0].mxu0
    %v604 = vadd.f32 %v459, %v603
    %v605 = vpop.f32.mrb[0].mxu0
    %606 = vdwg.mxu0
    %607 = vmatprep.subr.mxu0 0.0
    %608 = vmatpush1.msra.mxu0 %v227
    %609 = vmatprep.subr.mxu0 0.0
    %610 = vmatpush1.msra.mxu0 %v228
    %611 = vmatprep.subr.mxu0 0.0
    %612 = vmatpush1.msra.mxu0 %v229
    %613 = vmatprep.subr.mxu0 0.0
    %614 = vmatpush1.msra.mxu0 %v230
    %615 = vmatprep.subr.mxu0 0.0
    %616 = vmatpush1.msra.mxu0 %v231
    %617 = vmatprep.subr.mxu0 0.0
    %618 = vmatpush1.msra.mxu0 %v232
    %619 = vmatprep.subr.mxu0 0.0
    %620 = vmatpush1.msra.mxu0 %v233
    %621 = vmatprep.subr.mxu0 0.0
    %622 = vmatpush1.msra.mxu0 %v234
    %623 = vmatprep.subr.mxu0 0.0
    %624 = vmatpush1.msra.mxu0 %v235
    %625 = vmatprep.subr.mxu0 0.0
    %626 = vmatpush1.msra.mxu0 %v236
    %627 = vmatprep.subr.mxu0 0.0
    %628 = vmatpush1.msra.mxu0 %v237
    %629 = vmatprep.subr.mxu0 0.0
    %630 = vmatpush1.msra.mxu0 %v238
    %631 = vmatprep.subr.mxu0 0.0
    %632 = vmatpush1.msra.mxu0 %v239
    %633 = vmatprep.subr.mxu0 0.0
    %634 = vmatpush1.msra.mxu0 %v240
    %635 = vmatprep.subr.mxu0 0.0
    %636 = vmatpush1.msra.mxu0 %v241
    %637 = vmatprep.subr.mxu0 0.0
    %638 = vmatpush1.msra.mxu0 %v242
    %639 = vmatprep.subr.mxu0 0.0
    %640 = vmatpush1.msra.mxu0 %v243
    %641 = vmatprep.subr.mxu0 0.0
    %642 = vmatpush1.msra.mxu0 %v244
    %643 = vmatprep.subr.mxu0 0.0
    %644 = vmatpush1.msra.mxu0 %v245
    %645 = vmatprep.subr.mxu0 0.0
    %646 = vmatpush1.msra.mxu0 %v246
    %647 = vmatprep.subr.mxu0 0.0
    %648 = vmatpush1.msra.mxu0 %v247
    %649 = vmatprep.subr.mxu0 0.0
    %650 = vmatpush1.msra.mxu0 %v248
    %651 = vmatprep.subr.mxu0 0.0
    %652 = vmatpush1.msra.mxu0 %v249
    %653 = vmatprep.subr.mxu0 0.0
    %654 = vmatpush1.msra.mxu0 %v250
    %655 = vmatprep.subr.mxu0 0.0
    %656 = vmatpush1.msra.mxu0 %v251
    %657 = vmatprep.subr.mxu0 0.0
    %658 = vmatpush1.msra.mxu0 %v252
    %659 = vmatprep.subr.mxu0 0.0
    %660 = vmatpush1.msra.mxu0 %v253
    %661 = vmatprep.subr.mxu0 0.0
    %662 = vmatpush1.msra.mxu0 %v254
    %663 = vmatprep.subr.mxu0 0.0
    %664 = vmatpush1.msra.mxu0 %v255
    %665 = vmatprep.subr.mxu0 0.0
    %666 = vmatpush1.msra.mxu0 %v256
    %667 = vmatprep.subr.mxu0 0.0
    %668 = vmatpush1.msra.mxu0 %v257
    %669 = vmatprep.subr.mxu0 0.0
    %670 = vmatpush1.msra.mxu0 %v258
    %671 = vmatprep.mubr.f32.mxu0 %v56
    %672 = vmatmul.mubr.f32.gmra.mrb[0].mxu0 %v55
    %v673 = vpop.f32.mrb[0].mxu0
    %v674 = vadd.f32 %v529, %v673
    %v675 = vpop.f32.mrb[0].mxu0
    %676 = vmatprep.mubr.f32.mxu0 %v63
    %677 = vmatmul.mubr.f32.gmra.mrb[0].mxu0 %v62
    %v678 = vpop.f32.mrb[0].mxu0
    %v679 = vadd.f32 %v534, %v678
    %v680 = vpop.f32.mrb[0].mxu0
    %681 = vmatprep.mubr.f32.mxu0 %v70
    %682 = vmatmul.mubr.f32.gmra.mrb[0].mxu0 %v69
    %v683 = vpop.f32.mrb[0].mxu0
    %v684 = vadd.f32 %v539, %v683
    %v685 = vpop.f32.mrb[0].mxu0
    %686 = vmatprep.mubr.f32.mxu0 %v77
    %687 = vmatmul.mubr.f32.gmra.mrb[0].mxu0 %v76
    %v688 = vpop.f32.mrb[0].mxu0
    %v689 = vadd.f32 %v544, %v688
    %v690 = vpop.f32.mrb[0].mxu0
    %691 = vmatprep.mubr.f32.mxu0 %v84
    %692 = vmatmul.mubr.f32.gmra.mrb[0].mxu0 %v83
    %v693 = vpop.f32.mrb[0].mxu0
    %v694 = vadd.f32 %v549, %v693
    %v695 = vpop.f32.mrb[0].mxu0
    %696 = vmatprep.mubr.f32.mxu0 %v91
    %697 = vmatmul.mubr.f32.gmra.mrb[0].mxu0 %v90
    %v698 = vpop.f32.mrb[0].mxu0
    %v699 = vadd.f32 %v554, %v698
    %v700 = vpop.f32.mrb[0].mxu0
    %701 = vmatprep.mubr.f32.mxu0 %v98
    %702 = vmatmul.mubr.f32.gmra.mrb[0].mxu0 %v97
    %v703 = vpop.f32.mrb[0].mxu0
    %v704 = vadd.f32 %v559, %v703
    %v705 = vpop.f32.mrb[0].mxu0
    %706 = vmatprep.mubr.f32.mxu0 %v105
    %707 = vmatmul.mubr.f32.gmra.mrb[0].mxu0 %v104
    %v708 = vpop.f32.mrb[0].mxu0
    %v709 = vadd.f32 %v564, %v708
    %v710 = vpop.f32.mrb[0].mxu0
    %711 = vmatprep.mubr.f32.mxu0 %v112
    %712 = vmatmul.mubr.f32.gmra.mrb[0].mxu0 %v111
    %v713 = vpop.f32.mrb[0].mxu0
    %v714 = vadd.f32 %v569, %v713
    %v715 = vpop.f32.mrb[0].mxu0
    %716 = vmatprep.mubr.f32.mxu0 %v119
    %717 = vmatmul.mubr.f32.gmra.mrb[0].mxu0 %v118
    %v718 = vpop.f32.mrb[0].mxu0
    %v719 = vadd.f32 %v574, %v718
    %v720 = vpop.f32.mrb[0].mxu0
    %721 = vmatprep.mubr.f32.mxu0 %v126
    %722 = vmatmul.mubr.f32.gmra.mrb[0].mxu0 %v125
    %v723 = vpop.f32.mrb[0].mxu0
    %v724 = vadd.f32 %v579, %v723
    %v725 = vpop.f32.mrb[0].mxu0
    %726 = vmatprep.mubr.f32.mxu0 %v133
    %727 = vmatmul.mubr.f32.gmra.mrb[0].mxu0 %v132
    %v728 = vpop.f32.mrb[0].mxu0
    %v729 = vadd.f32 %v584, %v728
    %v730 = vpop.f32.mrb[0].mxu0
    %731 = vmatprep.mubr.f32.mxu0 %v140
    %732 = vmatmul.mubr.f32.gmra.mrb[0].mxu0 %v139
    %v733 = vpop.f32.mrb[0].mxu0
    %v734 = vadd.f32 %v589, %v733
    %v735 = vpop.f32.mrb[0].mxu0
    %736 = vmatprep.mubr.f32.mxu0 %v147
    %737 = vmatmul.mubr.f32.gmra.mrb[0].mxu0 %v146
    %v738 = vpop.f32.mrb[0].mxu0
    %v739 = vadd.f32 %v594, %v738
    %v740 = vpop.f32.mrb[0].mxu0
    %741 = vmatprep.mubr.f32.mxu0 %v154
    %742 = vmatmul.mubr.f32.gmra.mrb[0].mxu0 %v153
    %v743 = vpop.f32.mrb[0].mxu0
    %v744 = vadd.f32 %v599, %v743
    %v745 = vpop.f32.mrb[0].mxu0
    %746 = vmatprep.mubr.f32.mxu0 %v161
    %747 = vmatmul.mubr.f32.gmra.mrb[0].mxu0 %v160
    %v748 = vpop.f32.mrb[0].mxu0
    %v749 = vadd.f32 %v604, %v748
    %v750 = vpop.f32.mrb[0].mxu0
    %751 = vdwg.mxu0
    %752 = vmatprep.subr.mxu0 0.0
    %753 = vmatpush1.msra.mxu0 %v259
    %754 = vmatprep.subr.mxu0 0.0
    %755 = vmatpush1.msra.mxu0 %v260
    %756 = vmatprep.subr.mxu0 0.0
    %757 = vmatpush1.msra.mxu0 0.0
    %758 = vmatprep.subr.mxu0 0.0
    %759 = vmatpush1.msra.mxu0 0.0
    %760 = vmatprep.subr.mxu0 0.0
    %761 = vmatpush1.msra.mxu0 0.0
    %762 = vmatprep.subr.mxu0 0.0
    %763 = vmatpush1.msra.mxu0 0.0
    %764 = vmatprep.subr.mxu0 0.0
    %765 = vmatpush1.msra.mxu0 0.0
    %766 = vmatprep.subr.mxu0 0.0
    %767 = vmatpush1.msra.mxu0 0.0
    %768 = vmatprep.subr.mxu0 0.0
    %769 = vmatpush1.msra.mxu0 0.0
    %770 = vmatprep.subr.mxu0 0.0
    %771 = vmatpush1.msra.mxu0 0.0
    %772 = vmatprep.subr.mxu0 0.0
    %773 = vmatpush1.msra.mxu0 0.0
    %774 = vmatprep.subr.mxu0 0.0
    %775 = vmatpush1.msra.mxu0 0.0
    %776 = vmatprep.subr.mxu0 0.0
    %777 = vmatpush1.msra.mxu0 0.0
    %778 = vmatprep.subr.mxu0 0.0
    %779 = vmatpush1.msra.mxu0 0.0
    %780 = vmatprep.subr.mxu0 0.0
    %781 = vmatpush1.msra.mxu0 0.0
    %782 = vmatprep.subr.mxu0 0.0
    %783 = vmatpush1.msra.mxu0 0.0
    %784 = vmatprep.subr.mxu0 0.0
    %785 = vmatpush1.msra.mxu0 0.0
    %786 = vmatprep.subr.mxu0 0.0
    %787 = vmatpush1.msra.mxu0 0.0
    %788 = vmatprep.subr.mxu0 0.0
    %789 = vmatpush1.msra.mxu0 0.0
    %790 = vmatprep.subr.mxu0 0.0
    %791 = vmatpush1.msra.mxu0 0.0
    %792 = vmatprep.subr.mxu0 0.0
    %793 = vmatpush1.msra.mxu0 0.0
    %794 = vmatprep.subr.mxu0 0.0
    %795 = vmatpush1.msra.mxu0 0.0
    %796 = vmatprep.subr.mxu0 0.0
    %797 = vmatpush1.msra.mxu0 0.0
    %798 = vmatprep.subr.mxu0 0.0
    %799 = vmatpush1.msra.mxu0 0.0
    %800 = vmatprep.subr.mxu0 0.0
    %801 = vmatpush1.msra.mxu0 0.0
    %802 = vmatprep.subr.mxu0 0.0
    %803 = vmatpush1.msra.mxu0 0.0
    %804 = vmatprep.subr.mxu0 0.0
    %805 = vmatpush1.msra.mxu0 0.0
    %806 = vmatprep.subr.mxu0 0.0
    %807 = vmatpush1.msra.mxu0 0.0
    %808 = vmatprep.subr.mxu0 0.0
    %809 = vmatpush1.msra.mxu0 0.0
    %810 = vmatprep.subr.mxu0 0.0
    %811 = vmatpush1.msra.mxu0 0.0
    %812 = vmatprep.subr.mxu0 0.0
    %813 = vmatpush1.msra.mxu0 0.0
    %814 = vmatprep.subr.mxu0 0.0
    %815 = vmatpush1.msra.mxu0 0.0
    %816 = vmatprep.mubr.f32.mxu0 0.0
    %817 = vmatmul.mubr.f32.gmra.mrb[0].mxu0 %v270
    %v818 = vpop.f32.mrb[0].mxu0
    %v819 = vadd.f32 %v674, %v818
    %v820 = vpop.f32.mrb[0].mxu0
    %821 = vmatprep.mubr.f32.mxu0 0.0
    %822 = vmatmul.mubr.f32.gmra.mrb[0].mxu0 %v273
    %v823 = vpop.f32.mrb[0].mxu0
    %v824 = vadd.f32 %v679, %v823
    %v825 = vpop.f32.mrb[0].mxu0
    %826 = vmatprep.mubr.f32.mxu0 0.0
    %827 = vmatmul.mubr.f32.gmra.mrb[0].mxu0 %v276
    %v828 = vpop.f32.mrb[0].mxu0
    %v829 = vadd.f32 %v684, %v828
    %v830 = vpop.f32.mrb[0].mxu0
    %831 = vmatprep.mubr.f32.mxu0 0.0
    %832 = vmatmul.mubr.f32.gmra.mrb[0].mxu0 %v279
    %v833 = vpop.f32.mrb[0].mxu0
    %v834 = vadd.f32 %v689, %v833
    %v835 = vpop.f32.mrb[0].mxu0
    %836 = vmatprep.mubr.f32.mxu0 0.0
    %837 = vmatmul.mubr.f32.gmra.mrb[0].mxu0 %v282
    %v838 = vpop.f32.mrb[0].mxu0
    %v839 = vadd.f32 %v694, %v838
    %v840 = vpop.f32.mrb[0].mxu0
    %841 = vmatprep.mubr.f32.mxu0 0.0
    %842 = vmatmul.mubr.f32.gmra.mrb[0].mxu0 %v285
    %v843 = vpop.f32.mrb[0].mxu0
    %v844 = vadd.f32 %v699, %v843
    %v845 = vpop.f32.mrb[0].mxu0
    %846 = vmatprep.mubr.f32.mxu0 0.0
    %847 = vmatmul.mubr.f32.gmra.mrb[0].mxu0 %v288
    %v848 = vpop.f32.mrb[0].mxu0
    %v849 = vadd.f32 %v704, %v848
    %v850 = vpop.f32.mrb[0].mxu0
    %851 = vmatprep.mubr.f32.mxu0 0.0
    %852 = vmatmul.mubr.f32.gmra.mrb[0].mxu0 %v291
    %v853 = vpop.f32.mrb[0].mxu0
    %v854 = vadd.f32 %v709, %v853
    %v855 = vpop.f32.mrb[0].mxu0
    %856 = vmatprep.mubr.f32.mxu0 0.0
    %857 = vmatmul.mubr.f32.gmra.mrb[0].mxu0 %v294
    %v858 = vpop.f32.mrb[0].mxu0
    %v859 = vadd.f32 %v714, %v858
    %v860 = vpop.f32.mrb[0].mxu0
    %861 = vmatprep.mubr.f32.mxu0 0.0
    %862 = vmatmul.mubr.f32.gmra.mrb[0].mxu0 %v297
    %v863 = vpop.f32.mrb[0].mxu0
    %v864 = vadd.f32 %v719, %v863
    %v865 = vpop.f32.mrb[0].mxu0
    %866 = vmatprep.mubr.f32.mxu0 0.0
    %867 = vmatmul.mubr.f32.gmra.mrb[0].mxu0 %v300
    %v868 = vpop.f32.mrb[0].mxu0
    %v869 = vadd.f32 %v724, %v868
    %v870 = vpop.f32.mrb[0].mxu0
    %871 = vmatprep.mubr.f32.mxu0 0.0
    %872 = vmatmul.mubr.f32.gmra.mrb[0].mxu0 %v303
    %v873 = vpop.f32.mrb[0].mxu0
    %v874 = vadd.f32 %v729, %v873
    %v875 = vpop.f32.mrb[0].mxu0
    %876 = vmatprep.mubr.f32.mxu0 0.0
    %877 = vmatmul.mubr.f32.gmra.mrb[0].mxu0 %v306
    %v878 = vpop.f32.mrb[0].mxu0
    %v879 = vadd.f32 %v734, %v878
    %v880 = vpop.f32.mrb[0].mxu0
    %881 = vmatprep.mubr.f32.mxu0 0.0
    %882 = vmatmul.mubr.f32.gmra.mrb[0].mxu0 %v309
    %v883 = vpop.f32.mrb[0].mxu0
    %v884 = vadd.f32 %v739, %v883
    %v885 = vpop.f32.mrb[0].mxu0
    %886 = vmatprep.mubr.f32.mxu0 0.0
    %887 = vmatmul.mubr.f32.gmra.mrb[0].mxu0 %v312
    %v888 = vpop.f32.mrb[0].mxu0
    %v889 = vadd.f32 %v744, %v888
    %v890 = vpop.f32.mrb[0].mxu0
    %891 = vmatprep.mubr.f32.mxu0 0.0
    %892 = vmatmul.mubr.f32.gmra.mrb[0].mxu0 %v315
    %v893 = vpop.f32.mrb[0].mxu0
    %v894 = vadd.f32 %v749, %v893
    %v895 = vpop.f32.mrb[0].mxu0
    %896 = vdwg.mxu0
    %v897 = vmul.f32 %v819, 0.1
    %v898 = vmul.f32 %v824, 0.1
    %v899 = vmul.f32 %v829, 0.1
    %v900 = vmul.f32 %v834, 0.1
    %v901 = vmul.f32 %v839, 0.1
    %v902 = vmul.f32 %v844, 0.1
    %v903 = vmul.f32 %v849, 0.1
    %v904 = vmul.f32 %v854, 0.1
    %v905 = vmul.f32 %v859, 0.1
    %v906 = vmul.f32 %v864, 0.1
    %v907 = vmul.f32 %v869, 0.1
    %v908 = vmul.f32 %v874, 0.1
    %v909 = vmul.f32 %v879, 0.1
    %v910 = vmul.f32 %v884, 0.1
    %v911 = vmul.f32 %v889, 0.1
    %v912 = vmul.f32 %v894, 0.1
    %v913 = vmax.f32 %v819, %v897
    %v914 = vmax.f32 %v824, %v898
    %v915 = vmax.f32 %v829, %v899
    %v916 = vmax.f32 %v834, %v900
    %v917 = vmax.f32 %v839, %v901
    %v918 = vmax.f32 %v844, %v902
    %v919 = vmax.f32 %v849, %v903
    %v920 = vmax.f32 %v854, %v904
    %v921 = vmax.f32 %v859, %v905
    %v922 = vmax.f32 %v864, %v906
    %v923 = vmax.f32 %v869, %v907
    %v924 = vmax.f32 %v874, %v908
    %v925 = vmax.f32 %v879, %v909
    %v926 = vmax.f32 %v884, %v910
    %v927 = vmax.f32 %v889, %v911
    %v928 = vmax.f32 %v894, %v912
    %v929 = vld [vmem:[%s3] sm:$0x1]
    %v930 = vld [vmem:[#allocation2] sm:$0x1]
    %932 = vset.pattern.permute.xlu0 0
    %933 = vperm.xlu0 %932, %v930
    %v934 = vpop.permute.xlu0 %933
    %v936 = vlaneseq
    %v937 = vshrl.u32 %v936, 7
    %v938 = vsub.s32 0, %v937
    %v939 = vrot.slane %v934, %v938
    %940 = vmatprep.subr.mxu0 0.0
    %941 = vmatpush1.xpose.msra.mxu0 %v913
    %942 = vmatprep.subr.mxu0 0.0
    %943 = vmatpush1.xpose.msra.mxu0 %v914
    %944 = vmatprep.subr.mxu0 0.0
    %945 = vmatpush1.xpose.msra.mxu0 %v915
    %946 = vmatprep.subr.mxu0 0.0
    %947 = vmatpush1.xpose.msra.mxu0 %v916
    %948 = vmatprep.subr.mxu0 0.0
    %949 = vmatpush1.xpose.msra.mxu0 %v917
    %950 = vmatprep.subr.mxu0 0.0
    %951 = vmatpush1.xpose.msra.mxu0 %v918
    %952 = vmatprep.subr.mxu0 0.0
    %953 = vmatpush1.xpose.msra.mxu0 %v919
    %954 = vmatprep.subr.mxu0 0.0
    %955 = vmatpush1.xpose.msra.mxu0 %v920
    %956 = vmatprep.subr.mxu0 0.0
    %957 = vmatpush1.xpose.msra.mxu0 %v921
    %958 = vmatprep.subr.mxu0 0.0
    %959 = vmatpush1.xpose.msra.mxu0 %v922
    %960 = vmatprep.subr.mxu0 0.0
    %961 = vmatpush1.xpose.msra.mxu0 %v923
    %962 = vmatprep.subr.mxu0 0.0
    %963 = vmatpush1.xpose.msra.mxu0 %v924
    %964 = vmatprep.subr.mxu0 0.0
    %965 = vmatpush1.xpose.msra.mxu0 %v925
    %966 = vmatprep.subr.mxu0 0.0
    %967 = vmatpush1.xpose.msra.mxu0 %v926
    %968 = vmatprep.subr.mxu0 0.0
    %969 = vmatpush1.xpose.msra.mxu0 %v927
    %970 = vmatprep.subr.mxu0 0.0
    %971 = vmatpush1.xpose.msra.mxu0 %v928
    %972 = vmatprep.subr.mxu0 0.0
    %973 = vmatpush1.xpose.msra.mxu0 0.0
    %974 = vmatprep.subr.mxu0 0.0
    %975 = vmatpush1.xpose.msra.mxu0 0.0
    %976 = vmatprep.subr.mxu0 0.0
    %977 = vmatpush1.xpose.msra.mxu0 0.0
    %978 = vmatprep.subr.mxu0 0.0
    %979 = vmatpush1.xpose.msra.mxu0 0.0
    %980 = vmatprep.subr.mxu0 0.0
    %981 = vmatpush1.xpose.msra.mxu0 0.0
    %982 = vmatprep.subr.mxu0 0.0
    %983 = vmatpush1.xpose.msra.mxu0 0.0
    %984 = vmatprep.subr.mxu0 0.0
    %985 = vmatpush1.xpose.msra.mxu0 0.0
    %986 = vmatprep.subr.mxu0 0.0
    %987 = vmatpush1.xpose.msra.mxu0 0.0
    %988 = vmatprep.subr.mxu0 0.0
    %989 = vmatpush1.xpose.msra.mxu0 0.0
    %990 = vmatprep.subr.mxu0 0.0
    %991 = vmatpush1.xpose.msra.mxu0 0.0
    %992 = vmatprep.subr.mxu0 0.0
    %993 = vmatpush1.xpose.msra.mxu0 0.0
    %994 = vmatprep.subr.mxu0 0.0
    %995 = vmatpush1.xpose.msra.mxu0 0.0
    %996 = vmatprep.subr.mxu0 0.0
    %997 = vmatpush1.xpose.msra.mxu0 0.0
    %998 = vmatprep.subr.mxu0 0.0
    %999 = vmatpush1.xpose.msra.mxu0 0.0
    %1000 = vmatprep.subr.mxu0 0.0
    %1001 = vmatpush1.xpose.msra.mxu0 0.0
    %1002 = vmatprep.subr.mxu0 0.0
    %1003 = vmatpush1.xpose.msra.mxu0 0.0
    %1004 = vmatprep.mubr.f32.mxu0 0.0
    %1005 = vmatmul.mubr.f32.gmra.mrb[0].mxu0 %v929
    %v1006 = vpop.f32.mrb[0].mxu0
    %v1007 = vadd.f32 %v939, %v1006
    %v1008 = vpop.f32.mrb[0].mxu0
    %1009 = vdwg.mxu0
    %v1010 = vsub.f32 0.0, %v1007
    %v1011 = vmul.f32 %v1010, 1.442695
    %v1012 = vpow.pop %v1011
    %v1013 = vadd.f32 %v1012, 1.0
    %v1014 = vrcp.pop %v1013
    %v1015 = vmul.f32 1.0, %v1014
    %1016 = vst [vmem:[#allocation8] sm:$0x1] %v1015
    // Predicated region
    $region30: #{tpu_custom_call.1} parent=1 // pred_check
      _
    $region31: #{tpu_custom_call.1} parent=1 // pred_check_branch
      %1018 = sbr.rel (0) target = $region33
    $region32: #{tpu_custom_call.1} parent=1 // pred_region
      %s1020 = ssub.s32 16, 16
      %1021 = vsyncadd [#allocation5], %s1020
      %s1023 = sshll.u32 [#allocation8], 4
      %s1024 = int_to_ptr.vmem [resolvable:$true] %s1023
      %1026 = dma.vmem_to_hbm [thread:$0]  %s1024, 16, %s5, [#allocation5]
    $region33: #{tpu_custom_call.1} parent=1 // pred_fallthru
      _
    // Predicated region
    $region34: #{tpu_custom_call.1} parent=1 // pred_check
      _
    $region35: #{tpu_custom_call.1} parent=1 // pred_check_branch
      %1028 = sbr.rel (0) target = $region37
    $region36: #{tpu_custom_call.1} parent=1 // pred_region
      %1029 = dma.done [#allocation5], 16
    $region37: #{tpu_custom_call.1} parent=1 // pred_fallthru
      _
    %1030 = vsyncpa [#allocation4], 1
    %1031 = vsyncpa [#allocation7], 1
    %1032 = vsyncpa [#allocation5], 1

</llo_original>
